<compile_context>
chip_gen: v7x
topology: tpu7x:2x2x1
jax: 0.10.0
libtpu: 0.0.40
codegen_flags: <defaults>
</compile_context>

<pallas_src>
import math

import jax
import jax.numpy as jnp
from jax.experimental import pallas as pl
from jax.experimental.pallas import tpu as pltpu


def _round_up(a, b):
    return ((a + b - 1) // b) * b


def _htr_encoder_kernel(x_ref, w_ref, add_ref, o_ref):
    # x_ref:   (TW, Kp)  bf16 — TW width positions of ONE batch element
    # w_ref:   (Kp, Hp)  bf16 — full (padded) transposed Linear weight, resident
    # add_ref: (TW, Hp)  f32  — bias + positional encoding for these width rows
    # o_ref:   (TW, Hp)  out  — lane-dense, (8,128)-aligned output tile
    y = jnp.dot(x_ref[...], w_ref[...], preferred_element_type=jnp.float32)
    o_ref[...] = (y + add_ref[...]).astype(o_ref.dtype)


def htr_encoder_forward(x, weight, bias, pe_table, *, compute_dtype=jnp.bfloat16,
                        out_dtype=jnp.float32, force_pallas=False):
    """x: (batch, feature, height, width) float32.
    weight: (hidden, K) PyTorch Linear layout, K = feature*height.
    bias: (hidden,)
    pe_table: (max_len >= width, hidden)
    Returns (width, batch, hidden) in out_dtype."""
    batch, feature, height, width = x.shape
    hidden = weight.shape[0]
    K = feature * height
    assert weight.shape[1] == K
    assert pe_table.shape[0] >= width, "positional-encoding table shorter than width"

    # bias + PE folded once into a single (width, hidden) f32 additive table.
    add = pe_table[:width].astype(jnp.float32) + bias.astype(jnp.float32)[None, :]

    # Tiny-problem gate: one-grid-step Pallas calls are dominated by launch/DMA
    # overhead and K/H padding waste; XLA's fused dot wins there.
    if not force_pallas and (width * batch * K * hidden) < (1 << 22):
        x_seq = jnp.transpose(x, (3, 0, 1, 2)).reshape(width, batch, K)
        out = jnp.dot(x_seq.astype(compute_dtype), weight.T.astype(compute_dtype),
                      preferred_element_type=jnp.float32) + add[:, None, :]
        return out.astype(out_dtype)

    # --- Padded / tiled sizes ---------------------------------------------------
    Kp = _round_up(K, 128)
    Hp = _round_up(hidden, 128)
    itemsize_c = jnp.dtype(compute_dtype).itemsize
    itemsize_o = jnp.dtype(out_dtype).itemsize

    # Matmul row tile = TW width positions (per batch element).  TW == width
    # (<= 512) satisfies the "equal to full array dim" rule; 512 is a multiple of 8.
    TW = width if width <= 512 else 512

    def _vmem_bytes(tw):
        return (2 * tw * Kp * itemsize_c        # x tile, double-buffered
                + 2 * Kp * Hp * itemsize_c      # resident weight (default 2 bufs)
                + 2 * tw * Hp * 4               # bias+PE tile (f32)
                + 2 * tw * Hp * itemsize_o)     # output tile

    # Shrink the width tile only if a huge K/hidden would blow the v7x VMEM budget.
    while TW > 64 and TW % 16 == 0 and _vmem_bytes(TW) > (40 << 20):
        TW //= 2

    # Explicit scoped-VMEM limit: v5e default is 16 MiB; cap at 60 MiB (< v7x 64 MiB/TC).
    vmem_limit = int(min(max(_vmem_bytes(TW) + (4 << 20), 32 << 20), 60 << 20))

    # --- Wrapper-side layout plumbing (bf16 BEFORE the transpose halves its bytes) -
    x_bwk = jnp.transpose(x.astype(compute_dtype), (0, 3, 1, 2)).reshape(batch, width, K)
    x_p = jnp.pad(x_bwk, ((0, 0), (0, 0), (0, Kp - K)))                    # (B, W, Kp)
    w_p = jnp.pad(weight.T.astype(compute_dtype),
                  ((0, Kp - K), (0, Hp - hidden)))                         # (Kp, Hp)
    add_p = jnp.pad(add, ((0, 0), (0, Hp - hidden)))                       # (W, Hp) f32

    # Grid: width blocks outer, batch innermost -> the weight block (0,0) and the
    # bias+PE block (i,0) are constant across the inner batch loop, so Pallas
    # re-uses them without re-issuing their DMAs.
    grid = (pl.cdiv(width, TW), batch)

    bytes_accessed = (batch * width * Kp * itemsize_c     # x read
                      + Kp * Hp * itemsize_c              # weight read (once)
                      + width * Hp * 4                    # bias+PE read (once)
                      + batch * width * Hp * itemsize_o)  # output write

    out_p = pl.pallas_call(
        _htr_encoder_kernel,
        out_shape=jax.ShapeDtypeStruct((batch, width, Hp), out_dtype),
        grid_spec=pltpu.PrefetchScalarGridSpec(
            num_scalar_prefetch=0,
            grid=grid,
            in_specs=[
                # x: leading batch dim squeezed out; last-two block dims fully aligned.
                pl.BlockSpec((pl.Squeezed(), TW, Kp), lambda i, b: (b, i, 0)),
                # weight: constant block -> resident in VMEM for the whole grid.
                pl.BlockSpec((Kp, Hp), lambda i, b: (0, 0)),
                # bias+PE: indexed by width block only -> fetched once per width block.
                pl.BlockSpec((TW, Hp), lambda i, b: (i, 0)),
            ],
            out_specs=pl.BlockSpec((pl.Squeezed(), TW, Hp), lambda i, b: (b, i, 0)),
        ),
        compiler_params=pltpu.CompilerParams(
            dimension_semantics=("parallel", "parallel"),
            vmem_limit_bytes=vmem_limit,
        ),
        cost_estimate=pl.CostEstimate(
            flops=2 * batch * width * Kp * Hp,
            transcendentals=0,
            bytes_accessed=bytes_accessed,
        ),
    )(x_p, w_p, add_p)

    # (batch, width, Hp) -> (width, batch, hidden).  One output-sized layout pass
    # that also strips the hidden-lane padding (no separate slice copy).
    return jnp.transpose(out_p[:, :, :hidden], (1, 0, 2))


def make_positional_encoding(d_model, max_len):
    """Standard transformer sinusoidal PE, matching the common PyTorch impl."""
    position = jnp.arange(max_len, dtype=jnp.float32)[:, None]              # (L, 1)
    div_term = jnp.exp(jnp.arange(0, d_model, 2, dtype=jnp.float32)
                       * (-math.log(10000.0) / d_model))                    # (d/2,)
    pe = jnp.zeros((max_len, d_model), dtype=jnp.float32)
    pe = pe.at[:, 0::2].set(jnp.sin(position * div_term))
    pe = pe.at[:, 1::2].set(jnp.cos(position * div_term)[:, : d_model // 2])
    return pe


if __name__ == "__main__":
    # Small shapes consistent with the module.
    batch = 2
    feature_size = 4       # channels
    feature_height = 16
    feature_width = 16
    hidden_size = 32
    K = feature_height * feature_size

    key = jax.random.PRNGKey(0)
    kx, kw, kb = jax.random.split(key, 3)

    x = jax.random.normal(kx, (batch, feature_size, feature_height, feature_width),
                          dtype=jnp.float32)
    # Linear params (PyTorch layout: weight (out, in), bias (out,)).
    bound = 1.0 / math.sqrt(K)
    weight = jax.random.uniform(kw, (hidden_size, K), minval=-bound, maxval=bound,
                                dtype=jnp.float32)
    bias = jax.random.uniform(kb, (hidden_size,), minval=-bound, maxval=bound,
                              dtype=jnp.float32)
    pe_table = make_positional_encoding(hidden_size, feature_width)

    # Force the Pallas path (the tiny-shape gate would otherwise use the fallback).
    out = htr_encoder_forward(x, weight, bias, pe_table, force_pallas=True)
    out = jax.block_until_ready(out)
    assert out.shape == (feature_width, batch, hidden_size)

    # Reference in plain JAX using the same bf16-cast operands (f32 accumulate),
    # plus a looser check vs. the pure-f32 path.
    x_seq = jnp.transpose(x, (3, 0, 1, 2)).reshape(feature_width, batch, K)
    xb = x_seq.astype(jnp.bfloat16).astype(jnp.float32)
    wb = weight.T.astype(jnp.bfloat16).astype(jnp.float32)
    ref_bf16 = (jnp.einsum("wbk,kh->wbh", xb, wb)
                + bias[None, None, :] + pe_table[:feature_width, None, :])
    ref_f32 = (jnp.einsum("wbk,kh->wbh", x_seq, weight.T)
               + bias[None, None, :] + pe_table[:feature_width, None, :])
    assert jnp.allclose(out, ref_bf16, atol=2e-3, rtol=2e-3)
    assert jnp.allclose(out, ref_f32, atol=3e-2, rtol=3e-2)

    # The size-gated fallback path must agree with the kernel path.
    out_fb = htr_encoder_forward(x, weight, bias, pe_table)
    assert jnp.allclose(out, out_fb, atol=2e-3, rtol=2e-3)

    print("KERNEL_OK")
</pallas_src>

<mosaic_0001>
module attributes {stable_mosaic.version = 11 : i64} {
  func.func @_htr_encoder_kernel(%arg0: i32, %arg1: i32, %arg2: memref<1x16x128xbf16, #tpu.memory_space<vmem>>, %arg3: memref<128x128xbf16, #tpu.memory_space<vmem>>, %arg4: memref<16x128xf32, #tpu.memory_space<vmem>>, %arg5: memref<1x16x128xf32, #tpu.memory_space<vmem>>) attributes {dimension_semantics = [#tpu.dimension_semantics<parallel>, #tpu.dimension_semantics<parallel>], iteration_bounds = array<i64: 1, 2>, scalar_prefetch = 0 : i64, scratch_operands = 0 : i64, tpu.core_type = #tpu.core_type<tc>, window_params = [{transform_indices = @transform_0, window_bounds = array<i64: 1, 16, 128>}, {pipeline_mode = #tpu.pipeline_mode<synchronous>, transform_indices = @transform_1, window_bounds = array<i64: 128, 128>}, {transform_indices = @transform_2, window_bounds = array<i64: 16, 128>}, {transform_indices = @transform_3, window_bounds = array<i64: 1, 16, 128>}]} {
    %c0 = arith.constant 0 : index
    %c0_0 = arith.constant 0 : index
    %c0_1 = arith.constant 0 : index
    %0 = vector.load %arg2[%c0, %c0_0, %c0_1] : memref<1x16x128xbf16, #tpu.memory_space<vmem>>, vector<1x16x128xbf16>
    %1 = vector.shape_cast %0 : vector<1x16x128xbf16> to vector<16x128xbf16>
    %c0_2 = arith.constant 0 : index
    %c0_3 = arith.constant 0 : index
    %2 = vector.load %arg3[%c0_2, %c0_3] : memref<128x128xbf16, #tpu.memory_space<vmem>>, vector<128x128xbf16>
    %cst = arith.constant dense<0.000000e+00> : vector<16x128xf32>
    %3 = tpu.matmul %1, %2, %cst {dimension_numbers = #tpu.dot_dimension_numbers<[1], [0], [0], [1], [0, 0, 1, 1], [], []>} : vector<16x128xbf16>, vector<128x128xbf16>, vector<16x128xf32> -> vector<16x128xf32>
    %c0_4 = arith.constant 0 : index
    %c0_5 = arith.constant 0 : index
    %4 = vector.load %arg4[%c0_4, %c0_5] : memref<16x128xf32, #tpu.memory_space<vmem>>, vector<16x128xf32>
    %5 = arith.addf %3, %4 : vector<16x128xf32>
    %c0_6 = arith.constant 0 : index
    %c0_7 = arith.constant 0 : index
    %c0_8 = arith.constant 0 : index
    %6 = vector.load %arg5[%c0_6, %c0_7, %c0_8] : memref<1x16x128xf32, #tpu.memory_space<vmem>>, vector<1x16x128xf32>
    %7 = vector.shape_cast %6 : vector<1x16x128xf32> to vector<16x128xf32>
    %8 = vector.shape_cast %5 : vector<16x128xf32> to vector<1x16x128xf32>
    tpu.vector_store %arg5[%c0_6, %c0_7, %c0_8], %8 {strides = array<i32>} : memref<1x16x128xf32, #tpu.memory_space<vmem>>, vector<1x16x128xf32>,
    return
  }
  func.func @transform_0(%arg0: i32, %arg1: i32) -> (i32, i32, i32) {
    %c0_i32 = arith.constant 0 : i32
    %c0_i32_0 = arith.constant 0 : i32
    return %arg1, %arg0, %c0_i32 : i32, i32, i32
  }
  func.func @transform_1(%arg0: i32, %arg1: i32) -> (i32, i32) {
    %c0_i32 = arith.constant 0 : i32
    %c0_i32_0 = arith.constant 0 : i32
    %c0_i32_1 = arith.constant 0 : i32
    return %c0_i32, %c0_i32_0 : i32, i32
  }
  func.func @transform_2(%arg0: i32, %arg1: i32) -> (i32, i32) {
    %c0_i32 = arith.constant 0 : i32
    %c0_i32_0 = arith.constant 0 : i32
    return %arg0, %c0_i32 : i32, i32
  }
  func.func @transform_3(%arg0: i32, %arg1: i32) -> (i32, i32, i32) {
    %c0_i32 = arith.constant 0 : i32
    %c0_i32_0 = arith.constant 0 : i32
    return %arg1, %arg0, %c0_i32 : i32, i32, i32
  }
}

</mosaic_0001>

<llo_original>
// kernel: tpu_custom_call.1
$region0: #{tpu_custom_call.1}
  #allocation0 [shape = 'u32[]', space=smem, size = 0x4, offset = 0x4, fixed_abs, tag = 'smem constant byte address 0x4 - core index']
  #allocation1 [shape = 'u32[144,128]{1,0:T(1,128)}', space=vmem, size = 0x12000, scoped, tag = 'internal scratch']
  %s0 = inlined_call_operand.hbm [shape: bf16[2,16,128], index: 0, kind: input, shape index: {}]
  %s1 = inlined_call_operand.hbm [shape: bf16[128,128], index: 1, kind: input, shape index: {}]
  %s2 = inlined_call_operand.hbm [shape: f32[16,128], index: 2, kind: input, shape index: {}]
  %s3 = inlined_call_operand.hbm [shape: f32[2,16,128], index: 3, kind: output, shape index: {}]
  %s4 = sld [smem:[#allocation0]]
  $region57: #{tpu_custom_call.1} parent=0
    _
  %s6 = ssub.s32 1, %s4
  %s7 = scalar_select 0, %s6, %s4
  $region1: #{tpu_custom_call.1} parent=0
    #allocation2 [shape = 'u8[8192]{0}', space=vmem, size = 0x2000, scoped, tag = 'input window, operand 0']
    #allocation3 [shape = 's32[2]{0}', space=sflag, size = 0x8, scoped, tag = 'scoped memory for tpu_custom_call.1']
    #allocation4 [shape = 's32[2]{0}', space=sflag, size = 0x8, scoped, tag = 'scoped memory for tpu_custom_call.1']
    #allocation5 [shape = 'u8[32768]{0}', space=vmem, size = 0x8000, scoped, tag = 'input window, operand 1, single buffered']
    #allocation6 [shape = 's32[1]{0}', space=sflag, size = 0x4, scoped, tag = 'scoped memory for tpu_custom_call.1']
    #allocation7 [shape = 'u8[8192]{0}', space=vmem, size = 0x2000, scoped, tag = 'input window, operand 2, single buffered']
    #allocation8 [shape = 'u8[16384]{0}', space=vmem, size = 0x4000, scoped, tag = 'output window, operand 0']
    %8 = vsyncpa [#allocation3], 0
    %s9 = scalar_lea.sflag [#allocation3], 1
    %10 = vsyncpa %s9, 0
    %11 = vsyncpa [#allocation6], 0
    %12 = vsyncpa [#allocation4], 0
    %s13 = scalar_lea.sflag [#allocation4], 1
    %14 = vsyncpa %s13, 0
    loop: start=0, step=1, limit=4
    $region2: #{tpu_custom_call.1} parent=1 // loop_pre_header
      _
    $region3: #{tpu_custom_call.1} parent=1 // loop_header
      %s16 = sphi 0, %s20
      %p17 = scmp.ge.s32.totalorder %s16, 4
      %s23 = sphi 0, %s35
      %s24 = sphi 0, %s31
      %s25 = sphi 0, %s23
      %s26 = sphi 0, %s24
      %s27 = sphi 0, %s25
      %s28 = sphi 0, %s26
      %s40 = sphi 0, %s42
      %s43 = sphi 0, %s40
      %s44 = sphi 0, %s43
      %s60 = sphi 0, %s44
      %s64 = sphi 0, %s64
      %s66 = sphi 0, %s64
      %s67 = sphi 0, %s66
      %s81 = sphi 0, %s67
      %s87 = sphi 0, %s89
      %s90 = sphi 0, %s87
      %s91 = sphi 0, %s90
      %s107 = sphi 0, %s91
      %s115 = sphi 0, %s117
      %s118 = sphi 0, %s115
      %s119 = sphi 0, %s118
      %s135 = sphi 0, %s119
    $region4: #{tpu_custom_call.1} parent=1 // loop_header_branch
      %19 = sbr.rel (%p17) target = $region8
    $region5: #{tpu_custom_call.1} parent=1 // loop_body
      %s21 = ssub.s32 %s16, 1
      %s22 = ssub.s32 %s16, 2
      %s29 = sadd.s32 1, %s24
      %p30 = scmp.ge.s32.totalorder %s29, 2
      %s31 = scalar_select %p30, 0, %s29
      %s32 = sadd.s32 1, %s23
      %s33 = scalar_select %p30, %s32, %s23
      %p34 = scmp.ge.s32.totalorder %s33, 1
      %s35 = scalar_select %p34, 0, %s33
      %s36 = ssub.s32 %s24, %s31
      %s37 = ssub.s32 %s23, %s35
      %s38 = sor.u32 %s36, %s37
      %p39 = scmp.eq.s32.totalorder %s38, 0
      %s41 = sadd.s32 %s40, 1
      %s42 = scalar_select %p39, %s40, %s41
      %p45 = pneg %p39
      %p46 = scmp.eq.s32.totalorder %s16, 1
      %p47 = por %p45, %p46
      %p48 = scmp.ne.s32.totalorder %s40, %s43
      %p49 = scmp.eq.s32.totalorder %s16, 0
      %p50 = por %p48, %p49
      %p51 = scmp.ne.s32.totalorder %s40, %s43
      %p52 = scmp.eq.s32.totalorder %s21, 1
      %p53 = por %p51, %p52
      %p54 = scmp.ne.s32.totalorder %s43, %s44
      %p55 = scmp.eq.s32.totalorder %s21, 0
      %p56 = por %p54, %p55
      %p57 = scmp.ne.s32.totalorder %s43, %s44
      %p58 = scmp.eq.s32.totalorder %s22, 1
      %p59 = por %p57, %p58
      %p61 = scmp.ne.s32.totalorder %s44, %s60
      %p62 = scmp.eq.s32.totalorder %s22, 0
      %p63 = por %p61, %p62
      %s65 = sadd.s32 %s64, 1
      %p68 = scmp.eq.s32.totalorder %s16, 1
      %p69 = scmp.ne.s32.totalorder %s64, %s66
      %p70 = scmp.eq.s32.totalorder %s16, 0
      %p71 = por %p69, %p70
      %p72 = scmp.ne.s32.totalorder %s64, %s66
      %p73 = scmp.eq.s32.totalorder %s21, 1
      %p74 = por %p72, %p73
      %p75 = scmp.ne.s32.totalorder %s66, %s67
      %p76 = scmp.eq.s32.totalorder %s21, 0
      %p77 = por %p75, %p76
      %p78 = scmp.ne.s32.totalorder %s66, %s67
      %p79 = scmp.eq.s32.totalorder %s22, 1
      %p80 = por %p78, %p79
      %p82 = scmp.ne.s32.totalorder %s67, %s81
      %p83 = scmp.eq.s32.totalorder %s22, 0
      %p84 = por %p82, %p83
      %s85 = ssub.s32 %s23, %s35
      %p86 = scmp.eq.s32.totalorder %s85, 0
      %s88 = sadd.s32 %s87, 1
      %s89 = scalar_select %p86, %s87, %s88
      %p92 = pneg %p86
      %p93 = scmp.eq.s32.totalorder %s16, 1
      %p94 = por %p92, %p93
      %p95 = scmp.ne.s32.totalorder %s87, %s90
      %p96 = scmp.eq.s32.totalorder %s16, 0
      %p97 = por %p95, %p96
      %p98 = scmp.ne.s32.totalorder %s87, %s90
      %p99 = scmp.eq.s32.totalorder %s21, 1
      %p100 = por %p98, %p99
      %p101 = scmp.ne.s32.totalorder %s90, %s91
      %p102 = scmp.eq.s32.totalorder %s21, 0
      %p103 = por %p101, %p102
      %p104 = scmp.ne.s32.totalorder %s90, %s91
      %p105 = scmp.eq.s32.totalorder %s22, 1
      %p106 = por %p104, %p105
      %p108 = scmp.ne.s32.totalorder %s91, %s107
      %p109 = scmp.eq.s32.totalorder %s22, 0
      %p110 = por %p108, %p109
      %s111 = ssub.s32 %s24, %s31
      %s112 = ssub.s32 %s23, %s35
      %s113 = sor.u32 %s111, %s112
      %p114 = scmp.eq.s32.totalorder %s113, 0
      %s116 = sadd.s32 %s115, 1
      %s117 = scalar_select %p114, %s115, %s116
      %p120 = pneg %p114
      %p121 = scmp.eq.s32.totalorder %s16, 1
      %p122 = por %p120, %p121
      %p123 = scmp.ne.s32.totalorder %s115, %s118
      %p124 = scmp.eq.s32.totalorder %s16, 0
      %p125 = por %p123, %p124
      %p126 = scmp.ne.s32.totalorder %s115, %s118
      %p127 = scmp.eq.s32.totalorder %s21, 1
      %p128 = por %p126, %p127
      %p129 = scmp.ne.s32.totalorder %s118, %s119
      %p130 = scmp.eq.s32.totalorder %s21, 0
      %p131 = por %p129, %p130
      %p132 = scmp.ne.s32.totalorder %s118, %s119
      %p133 = scmp.eq.s32.totalorder %s22, 1
      %p134 = por %p132, %p133
      %p136 = scmp.ne.s32.totalorder %s119, %s135
      %p137 = scmp.eq.s32.totalorder %s22, 0
      %p138 = por %p136, %p137
      %p139 = scmp.le.s32.totalorder 1, %s16
      %p140 = scmp.lt.s32.totalorder %s16, 3
      %p141 = pnand %p139, %p140
      %p142 = pneg %p141
      // Predicated region
      $region9: #{tpu_custom_call.1} parent=5 // pred_check
        _
      $region10: #{tpu_custom_call.1} parent=5 // pred_check_branch
        %144 = sbr.rel (%p141) target = $region12
      $region11: #{tpu_custom_call.1} parent=5 // pred_region
        %s145 = ssub.s32 %s16, 1
        // Predicated region
        $region13: #{tpu_custom_call.1} parent=11 // pred_check
          %p146 = pneg %p77
        $region14: #{tpu_custom_call.1} parent=11 // pred_check_branch
          %148 = sbr.rel (%p146) target = $region16
        $region15: #{tpu_custom_call.1} parent=11 // pred_region
          %s150 = ssub.s32 1024, 1024
          %151 = vsyncadd [#allocation6], %s150
          %s152 = sshll.u32 [#allocation5], 4
          %s153 = int_to_ptr.vmem [resolvable:$true] %s152
          %158 = dma.hbm_to_vmem [thread:$0]  %s1, 1024, %s153, [#allocation6], 64, 64, 4
        $region16: #{tpu_custom_call.1} parent=11 // pred_fallthru
          _
        // Predicated region
        $region17: #{tpu_custom_call.1} parent=11 // pred_check
          %p159 = pneg %p103
        $region18: #{tpu_custom_call.1} parent=11 // pred_check_branch
          %161 = sbr.rel (%p159) target = $region20
        $region19: #{tpu_custom_call.1} parent=11 // pred_region
          %s162 = smul.u32 2, %s25
          %s164 = ssub.s32 256, 256
          %165 = vsyncadd [#allocation6], %s164
          %s166 = smul.addr %s162, 128
          %s167 = scalar_lea.hbm %s2, %s166
          %s168 = sshll.u32 [#allocation7], 4
          %s169 = int_to_ptr.vmem [resolvable:$true] %s168
          %174 = dma.hbm_to_vmem [thread:$0]  %s167, 256, %s169, [#allocation6], 128, 128, 8
        $region20: #{tpu_custom_call.1} parent=11 // pred_fallthru
          _
      $region12: #{tpu_custom_call.1} parent=5 // pred_fallthru
        _
      %p175 = scmp.lt.s32.totalorder %s16, 2
      // Predicated region
      $region21: #{tpu_custom_call.1} parent=5 // pred_check
        %p176 = pneg %p175
      $region22: #{tpu_custom_call.1} parent=5 // pred_check_branch
        %178 = sbr.rel (%p176) target = $region24
      $region23: #{tpu_custom_call.1} parent=5 // pred_region
        // Predicated region
        $region25: #{tpu_custom_call.1} parent=23 // pred_check
          %p179 = pneg %p50
        $region26: #{tpu_custom_call.1} parent=23 // pred_check_branch
          %181 = sbr.rel (%p179) target = $region28
        $region27: #{tpu_custom_call.1} parent=23 // pred_region
          %s182 = sand.u32 %s40, 1
          %s183 = scalar_lea.sflag [#allocation3], %s182
          %s184 = sand.u32 %s40, 1
          %s185 = smul.addr %s184, 8
          %s186 = scalar_lea.vmem [#allocation2], %s185
          %s187 = smul.u32 2, %s23
          %s189 = ssub.s32 128, 128
          %190 = vsyncadd %s183, %s189
          %s191 = smul.addr %s24, 2
          %s192 = sadd.s32 %s187, %s191
          %s193 = smul.addr %s192, 64
          %s194 = scalar_lea.hbm %s0, %s193
          %s195 = sshll.u32 %s186, 4
          %s196 = int_to_ptr.vmem [resolvable:$true] %s195
          %201 = dma.hbm_to_vmem [thread:$0]  %s194, 128, %s196, %s183, 64, 64, 4
        $region28: #{tpu_custom_call.1} parent=23 // pred_fallthru
          _
      $region24: #{tpu_custom_call.1} parent=5 // pred_fallthru
        _
      %p202 = scmp.le.s32.totalorder 1, %s16
      %p203 = scmp.lt.s32.totalorder %s16, 3
      %p204 = pnand %p202, %p203
      %p205 = pneg %p204
      // Predicated region
      $region29: #{tpu_custom_call.1} parent=5 // pred_check
        _
      $region30: #{tpu_custom_call.1} parent=5 // pred_check_branch
        %207 = sbr.rel (%p204) target = $region32
      $region31: #{tpu_custom_call.1} parent=5 // pred_region
        %s208 = ssub.s32 %s16, 1
        %s209 = sand.u32 %s43, 1
        %s210 = scalar_lea.sflag [#allocation3], %s209
        %s211 = sand.u32 %s43, 1
        %s212 = smul.addr %s211, 8
        %s213 = scalar_lea.vmem [#allocation2], %s212
        // Predicated region
        $region33: #{tpu_custom_call.1} parent=31 // pred_check
          %p214 = pneg %p56
        $region34: #{tpu_custom_call.1} parent=31 // pred_check_branch
          %216 = sbr.rel (%p214) target = $region36
        $region35: #{tpu_custom_call.1} parent=31 // pred_region
          %217 = dma.done %s210, 128
        $region36: #{tpu_custom_call.1} parent=31 // pred_fallthru
          _
        // Predicated region
        $region37: #{tpu_custom_call.1} parent=31 // pred_check
          %p218 = pneg %p77
        $region38: #{tpu_custom_call.1} parent=31 // pred_check_branch
          %220 = sbr.rel (%p218) target = $region40
        $region39: #{tpu_custom_call.1} parent=31 // pred_region
          %221 = dma.done [#allocation6], 1024
        $region40: #{tpu_custom_call.1} parent=31 // pred_fallthru
          _
        // Predicated region
        $region41: #{tpu_custom_call.1} parent=31 // pred_check
          %p222 = pneg %p103
        $region42: #{tpu_custom_call.1} parent=31 // pred_check_branch
          %224 = sbr.rel (%p222) target = $region44
        $region43: #{tpu_custom_call.1} parent=31 // pred_region
          %225 = dma.done [#allocation6], 256
        $region44: #{tpu_custom_call.1} parent=31 // pred_fallthru
          _
        %s226 = sand.u32 %s43, 1
        %s227 = scalar_lea.sflag [#allocation3], %s226
        %s228 = sand.u32 %s43, 1
        %s229 = smul.addr %s228, 8
        %s230 = scalar_lea.vmem [#allocation2], %s229
        %p231 = pneg %p56
        %p232 = pneg %p53
        %p233 = pneg %p77
        %p234 = pneg %p74
        %p235 = pneg %p103
        %p236 = pneg %p100
        %p237 = pneg %p131
        %p238 = pneg %p128
        %s239 = sand.u32 %s118, 1
        %s240 = scalar_lea.sflag [#allocation4], %s239
        %s241 = sand.u32 %s118, 1
        %s242 = smul.addr %s241, 16
        %s243 = scalar_lea.vmem [#allocation8], %s242
        %s244 = smul.u32 2, %s25
        %s245 = smul.u32 2, %s25
        %s246 = smul.u32 2, %s25
        %v248 = vld [vmem:[%s213] sm:$0xf]
        %v249 = vld [vmem:[%s213 + $0x4] sm:$0xf]
        %v250 = vld [vmem:[#allocation5] sm:$0xf]
        %v251 = vld [vmem:[#allocation5 + $0x4] sm:$0xf]
        %v252 = vld [vmem:[#allocation5 + $0x8] sm:$0xf]
        %v253 = vld [vmem:[#allocation5 + $0xc] sm:$0xf]
        %v254 = vld [vmem:[#allocation5 + $0x10] sm:$0xf]
        %v255 = vld [vmem:[#allocation5 + $0x14] sm:$0xf]
        %v256 = vld [vmem:[#allocation5 + $0x18] sm:$0xf]
        %v257 = vld [vmem:[#allocation5 + $0x1c] sm:$0xf]
        %v258 = vld [vmem:[#allocation5 + $0x20] sm:$0xf]
        %v259 = vld [vmem:[#allocation5 + $0x24] sm:$0xf]
        %v260 = vld [vmem:[#allocation5 + $0x28] sm:$0xf]
        %v261 = vld [vmem:[#allocation5 + $0x2c] sm:$0xf]
        %v262 = vld [vmem:[#allocation5 + $0x30] sm:$0xf]
        %v263 = vld [vmem:[#allocation5 + $0x34] sm:$0xf]
        %v264 = vld [vmem:[#allocation5 + $0x38] sm:$0xf]
        %v265 = vld [vmem:[#allocation5 + $0x3c] sm:$0xf]
        %v266 = vld [vmem:[#allocation7] sm:$0xff]
        %v267 = vld [vmem:[#allocation7 + $0x8] sm:$0xff]
        %v270 = vunpack.c.l.b16 %v248
        %v271 = vunpack.c.l.b16 %v249
        %v272 = vpack.c.b16 %v271, %v270
        %v290 = vunpack.c.l.b16 %v250
        %v291 = vunpack.c.l.b16 %v251
        %v292 = vunpack.c.l.b16 %v252
        %v293 = vunpack.c.l.b16 %v253
        %v294 = vunpack.c.l.b16 %v254
        %v295 = vunpack.c.l.b16 %v255
        %v296 = vunpack.c.l.b16 %v256
        %v297 = vunpack.c.l.b16 %v257
        %v298 = vunpack.c.l.b16 %v258
        %v299 = vunpack.c.l.b16 %v259
        %v300 = vunpack.c.l.b16 %v260
        %v301 = vunpack.c.l.b16 %v261
        %v302 = vunpack.c.l.b16 %v262
        %v303 = vunpack.c.l.b16 %v263
        %v304 = vunpack.c.l.b16 %v264
        %v305 = vunpack.c.l.b16 %v265
        %v306 = vpack.c.b16 %v291, %v290
        %v307 = vpack.c.b16 %v293, %v292
        %v308 = vpack.c.b16 %v295, %v294
        %v309 = vpack.c.b16 %v297, %v296
        %v310 = vpack.c.b16 %v299, %v298
        %v311 = vpack.c.b16 %v301, %v300
        %v312 = vpack.c.b16 %v303, %v302
        %v313 = vpack.c.b16 %v305, %v304
        %322 = vmatprep.subr.bf16.mxu0 0
        %323 = vmatpush1.bf16.msra.mxu0 %v306
        %324 = vmatprep.subr.bf16.mxu0 0
        %325 = vmatpush1.bf16.msra.mxu0 %v307
        %326 = vmatprep.subr.bf16.mxu0 0
        %327 = vmatpush1.bf16.msra.mxu0 %v308
        %328 = vmatprep.subr.bf16.mxu0 0
        %329 = vmatpush1.bf16.msra.mxu0 %v309
        %330 = vmatprep.subr.bf16.mxu0 0
        %331 = vmatpush1.bf16.msra.mxu0 %v310
        %332 = vmatprep.subr.bf16.mxu0 0
        %333 = vmatpush1.bf16.msra.mxu0 %v311
        %334 = vmatprep.subr.bf16.mxu0 0
        %335 = vmatpush1.bf16.msra.mxu0 %v312
        %336 = vmatprep.subr.bf16.mxu0 0
        %337 = vmatpush1.bf16.msra.mxu0 %v313
        %338 = vmatprep.subr.bf16.mxu0 0
        %339 = vmatpush1.bf16.msra.mxu0 0
        %340 = vmatprep.subr.bf16.mxu0 0
        %341 = vmatpush1.bf16.msra.mxu0 0
        %342 = vmatprep.subr.bf16.mxu0 0
        %343 = vmatpush1.bf16.msra.mxu0 0
        %344 = vmatprep.subr.bf16.mxu0 0
        %345 = vmatpush1.bf16.msra.mxu0 0
        %346 = vmatprep.subr.bf16.mxu0 0
        %347 = vmatpush1.bf16.msra.mxu0 0
        %348 = vmatprep.subr.bf16.mxu0 0
        %349 = vmatpush1.bf16.msra.mxu0 0
        %350 = vmatprep.subr.bf16.mxu0 0
        %351 = vmatpush1.bf16.msra.mxu0 0
        %352 = vmatprep.subr.bf16.mxu0 0
        %353 = vmatpush1.bf16.msra.mxu0 0
        %354 = vmatprep.mubr.bf16.mxu0 0
        %355 = vmatmul.mubr.bf16.gmra.mrb[0].mxu0 %v272
        %v356 = vpop.f32.mrb[0].mxu0
        %v357 = vadd.f32 %v266, %v356
        %v358 = vpop.f32.mrb[0].mxu0
        %v359 = vpop.f32.mrb[0].mxu0
        %v360 = vadd.f32 %v267, %v359
        %v361 = vpop.f32.mrb[0].mxu0
        %362 = vdwg.mxu0
        %363 = vst [vmem:[%s243] sm:$0xff] %v357
        %364 = vst [vmem:[%s243 + $0x8] sm:$0xff] %v360
        %s365 = sand.u32 %s118, 1
        %s366 = scalar_lea.sflag [#allocation4], %s365
        %s367 = sand.u32 %s118, 1
        %s368 = smul.addr %s367, 16
        %s369 = scalar_lea.vmem [#allocation8], %s368
        // Predicated region
        $region45: #{tpu_custom_call.1} parent=31 // pred_check
          %p370 = pneg %p128
        $region46: #{tpu_custom_call.1} parent=31 // pred_check_branch
          %372 = sbr.rel (%p370) target = $region48
        $region47: #{tpu_custom_call.1} parent=31 // pred_region
          %s373 = smul.u32 2, %s25
          %s375 = ssub.s32 256, 256
          %376 = vsyncadd %s366, %s375
          %s377 = smul.addr %s26, 2
          %s378 = sadd.s32 %s373, %s377
          %s379 = smul.addr %s378, 128
          %s380 = scalar_lea.hbm %s3, %s379
          %s381 = sshll.u32 %s369, 4
          %s382 = int_to_ptr.vmem [resolvable:$true] %s381
          %387 = dma.vmem_to_hbm [thread:$0]  %s382, 256, %s380, %s366, 128, 128, 8
        $region48: #{tpu_custom_call.1} parent=31 // pred_fallthru
          _
      $region32: #{tpu_custom_call.1} parent=5 // pred_fallthru
        _
      %p388 = scmp.le.s32.totalorder 2, %s16
      // Predicated region
      $region49: #{tpu_custom_call.1} parent=5 // pred_check
        %p389 = pneg %p388
      $region50: #{tpu_custom_call.1} parent=5 // pred_check_branch
        %391 = sbr.rel (%p389) target = $region52
      $region51: #{tpu_custom_call.1} parent=5 // pred_region
        %s392 = ssub.s32 %s16, 2
        // Predicated region
        $region53: #{tpu_custom_call.1} parent=51 // pred_check
          %p393 = pneg %p134
        $region54: #{tpu_custom_call.1} parent=51 // pred_check_branch
          %395 = sbr.rel (%p393) target = $region56
        $region55: #{tpu_custom_call.1} parent=51 // pred_region
          %s396 = sand.u32 %s119, 1
          %s397 = scalar_lea.sflag [#allocation4], %s396
          %s398 = sand.u32 %s119, 1
          %s399 = smul.addr %s398, 16
          %s400 = scalar_lea.vmem [#allocation8], %s399
          %401 = dma.done %s397, 256
        $region56: #{tpu_custom_call.1} parent=51 // pred_fallthru
          _
      $region52: #{tpu_custom_call.1} parent=5 // pred_fallthru
        _
    $region6: #{tpu_custom_call.1} parent=1 // loop_footer
      %s20 = sadd.s32 1, %s16
    $region7: #{tpu_custom_call.1} parent=1 // loop_footer_branch
      %15 = sbr.rel target = $region3
    $region8: #{tpu_custom_call.1} parent=1 // loop_exit
      _
    %402 = vsyncpa [#allocation3], 1
    %s403 = scalar_lea.sflag [#allocation3], 1
    %404 = vsyncpa %s403, 1
    %405 = vsyncpa [#allocation6], 1
    %406 = vsyncpa [#allocation4], 1
    %s407 = scalar_lea.sflag [#allocation4], 1
    %408 = vsyncpa %s407, 1

</llo_original>
